<compile_context>
chip_gen: v7x
topology: tpu7x:2x2x1
jax: 0.10.0
libtpu: 0.0.40
codegen_flags: <defaults>
</compile_context>

<pallas_src>
import functools

import jax
import jax.numpy as jnp
from jax import lax
from jax.experimental import pallas as pl
from jax.experimental.pallas import tpu as pltpu


def _convT3x3_kernel(x_ref, wa_ref, wb_ref, wc_ref, wd_ref, bias_ref, out_ref,
                     *, img_w: int, cout: int, apply_act: bool):
    """Fused stride-2 transposed 3x3 conv (parity form) + bias (+ReLU).

    x_ref   : (TB, Cin, H*W)    bf16, channel-major, lane-dense
    wa_ref  : (4*Cout, Cin)     bf16 taps applied to x(i, j)     rows [ee|eo|oe|oo]
    wb_ref  : (2*Cout, Cin)     bf16 taps applied to x(i, j+1)   rows [eo|oo]
    wc_ref  : (2*Cout, Cin)     bf16 taps applied to x(i+1, j)   rows [oe|oo]
    wd_ref  : (  Cout, Cin)     bf16 taps applied to x(i+1, j+1) rows [oo]
    bias_ref: (Cout, 1)         f32 per-channel bias (conv bias or folded BN)
    out_ref : (TB, 4*Cout, H*W) parity-blocked output planes [ee, eo, oe, oo]
    """
    C = cout
    wa = wa_ref[...]
    wb = wb_ref[...]
    wc = wc_ref[...]
    wd = wd_ref[...]
    bias = bias_ref[...]                                   # (C, 1) f32

    def emit(b, plane, y):                                 # f32 epilogue + store
        if apply_act:
            y = jnp.maximum(y, 0.0)                        # ReLU
        out_ref[b, plane * C:(plane + 1) * C, :] = y.astype(out_ref.dtype)

    tb = x_ref.shape[0]
    for b in range(tb):                                    # static, small
        x = x_ref[b]                                       # (Cin, H*W) bf16
        # Shifted inputs x(i,j+1), x(i+1,j), x(i+1,j+1).  The wrap-around only
        # ever contributes to output row 2H-1 / col 2W-1, which the wrapper
        # crops away, so no masking is needed.
        x01 = jnp.roll(x, -1, axis=1)
        x10 = jnp.roll(x, -img_w, axis=1)
        x11 = jnp.roll(x, -(img_w + 1), axis=1)

        # Only the 9 real taps hit the MXU; bf16 inputs, f32 accumulation.
        ya = jnp.dot(wa, x, preferred_element_type=jnp.float32)    # (4C, HW)
        yb = jnp.dot(wb, x01, preferred_element_type=jnp.float32)  # (2C, HW)
        yc = jnp.dot(wc, x10, preferred_element_type=jnp.float32)  # (2C, HW)
        yd = jnp.dot(wd, x11, preferred_element_type=jnp.float32)  # ( C, HW)

        # Parity planes (Cout slices are sublane-aligned when Cout % 8 == 0).
        emit(b, 0, ya[0 * C:1 * C] + bias)                                    # even h, even w
        emit(b, 1, ya[1 * C:2 * C] + yb[0 * C:1 * C] + bias)                  # even h, odd  w
        emit(b, 2, ya[2 * C:3 * C] + yc[0 * C:1 * C] + bias)                  # odd  h, even w
        emit(b, 3, ya[3 * C:4 * C] + yb[1 * C:2 * C] + yc[1 * C:2 * C] + yd + bias)  # odd/odd


def fold_bn(gamma, beta, mean, var, eps=1e-5):
    scale = gamma / jnp.sqrt(var + eps)
    return scale, beta - mean * scale


def conv_transposed3x3(x_nchw, weight, conv_bias=None, bn=None, act=False,
                       out_dtype=None, batch_block=8):
    """PyTorch ConvTransposed3x3.forward.

    x_nchw   : (N, Cin, H, W)   f32 (PyTorch layout)
    weight   : (Cin, Cout, 3, 3) PyTorch ConvTranspose2d layout
    conv_bias: (Cout,) or None   (used when bn is None; bias='auto')
    bn       : optional (gamma, beta, running_mean, running_var) -> eval BN
    act      : apply ReLU
    returns (N, Cout, 2H-1, 2W-1)
    """
    N, Cin, H, W = x_nchw.shape
    Cout = weight.shape[1]
    if out_dtype is None:
        out_dtype = x_nchw.dtype

    # Fold conv-bias / eval BatchNorm into one per-channel affine.
    if bn is not None:
        scale, bias = fold_bn(*bn)
    else:
        scale = jnp.ones((Cout,), jnp.float32)
        bias = conv_bias if conv_bias is not None else jnp.zeros((Cout,), jnp.float32)

    # --- tap matrices (trace-time, scale pre-folded in f32, then bf16) ------
    # y[co, 2i+ph, 2j+pw] = sum_{ci,kh,kw} x[ci,ih,iw] * w[ci,co,kh,kw]
    #   with 2*ih + kh = (2i+ph) + 1  and  2*iw + kw = (2j+pw) + 1.
    wt = jnp.transpose(weight, (1, 0, 2, 3)).astype(jnp.float32)   # (Cout, Cin, kh, kw)
    wt = wt * scale.astype(jnp.float32)[:, None, None, None]       # exact: affine commutes

    def tap(kh, kw):
        return wt[:, :, kh, kw]                                    # (Cout, Cin)

    wa = jnp.concatenate([tap(1, 1), tap(1, 2), tap(2, 1), tap(2, 2)], axis=0)  # * x(i,   j  )
    wb = jnp.concatenate([tap(1, 0), tap(2, 0)], axis=0)                        # * x(i,   j+1)
    wc = jnp.concatenate([tap(0, 1), tap(0, 2)], axis=0)                        # * x(i+1, j  )
    wd = tap(0, 0)                                                              # * x(i+1, j+1)
    wa, wb, wc, wd = (w.astype(jnp.bfloat16) for w in (wa, wb, wc, wd))
    bias2d = bias.astype(jnp.float32).reshape(Cout, 1)

    # bf16 activations: native MXU dtype everywhere, half the HBM/VMEM traffic.
    x_flat = x_nchw.reshape(N, Cin, H * W).astype(jnp.bfloat16)    # contiguous reshape

    # Batch-block several images per grid step (amortize ~0.35us/step, big DMAs).
    tb = max(1, min(batch_block, N))
    while N % tb:
        tb -= 1

    kernel = functools.partial(_convT3x3_kernel, img_w=W, cout=Cout, apply_act=act)
    y = pl.pallas_call(
        kernel,
        out_shape=jax.ShapeDtypeStruct((N, 4 * Cout, H * W), out_dtype),
        grid=(N // tb,),
        in_specs=[
            pl.BlockSpec((tb, Cin, H * W), lambda n: (n, 0, 0)),
            pl.BlockSpec((4 * Cout, Cin), lambda n: (0, 0)),
            pl.BlockSpec((2 * Cout, Cin), lambda n: (0, 0)),
            pl.BlockSpec((2 * Cout, Cin), lambda n: (0, 0)),
            pl.BlockSpec((Cout, Cin), lambda n: (0, 0)),
            pl.BlockSpec((Cout, 1), lambda n: (0, 0)),
        ],
        out_specs=pl.BlockSpec((tb, 4 * Cout, H * W), lambda n: (n, 0, 0)),
        compiler_params=pltpu.CompilerParams(dimension_semantics=("parallel",)),
    )(x_flat, wa, wb, wc, wd, bias2d)                              # (N, 4*Cout, H*W)

    # Layout plumbing only: interleave the four parity planes into NCHW, crop.
    y = y.reshape(N, 2, 2, Cout, H, W)                             # (n, ph, pw, c, i, j)
    y = jnp.transpose(y, (0, 3, 4, 1, 5, 2)).reshape(N, Cout, 2 * H, 2 * W)
    return y[:, :, : 2 * H - 1, : 2 * W - 1]


# --- pure-JAX reference for correctness -------------------------------------
def reference(x_nchw, weight, scale, bias, act):
    # Same bf16 rounding of the operands as the kernel (scale folded first),
    # then f32 math -> tight comparison tolerance.
    w_fold = (weight.astype(jnp.float32) * scale.reshape(1, -1, 1, 1))
    w_fold = w_fold.astype(jnp.bfloat16).astype(jnp.float32)
    x32 = x_nchw.astype(jnp.bfloat16).astype(jnp.float32)
    # ConvTranspose2d == lhs-dilated cross-correlation with flipped/swapped kernel.
    w_oihw = jnp.transpose(w_fold[:, :, ::-1, ::-1], (1, 0, 2, 3))
    y = lax.conv_general_dilated(
        x32, w_oihw, window_strides=(1, 1), padding=((1, 1), (1, 1)),
        lhs_dilation=(2, 2), dimension_numbers=("NCHW", "OIHW", "NCHW"),
        precision=lax.Precision.HIGHEST)
    y = y + bias.reshape(1, -1, 1, 1)
    return jnp.maximum(y, 0.0) if act else y


if __name__ == "__main__":
    key = jax.random.PRNGKey(0)
    ks = jax.random.split(key, 7)
    N, Cin, Cout, H, W = 2, 4, 8, 16, 16

    x = jax.random.normal(ks[0], (N, Cin, H, W), jnp.float32)          # NCHW like PyTorch
    weight = 0.1 * jax.random.normal(ks[1], (Cin, Cout, 3, 3), jnp.float32)
    conv_b = 0.1 * jax.random.normal(ks[2], (Cout,), jnp.float32)
    gamma = 1.0 + 0.1 * jax.random.normal(ks[3], (Cout,), jnp.float32)
    beta = 0.1 * jax.random.normal(ks[4], (Cout,), jnp.float32)
    mean = 0.05 * jax.random.normal(ks[5], (Cout,), jnp.float32)
    var = jnp.abs(0.5 + 0.1 * jax.random.normal(ks[6], (Cout,), jnp.float32))

    # Config A: ConvTransposed3x3(in, out)             -> bias='auto' => conv bias, no norm/act
    out_a = conv_transposed3x3(x, weight, conv_bias=conv_b)
    ref_a = reference(x, weight, jnp.ones((Cout,), jnp.float32), conv_b, act=False)

    # Config B: ConvTransposed3x3(in, out, norm=True, act=True) -> bias=False, BN(eval), ReLU
    out_b = conv_transposed3x3(x, weight, bn=(gamma, beta, mean, var), act=True)
    s_b, b_b = fold_bn(gamma, beta, mean, var)
    ref_b = reference(x, weight, s_b, b_b, act=True)

    jax.block_until_ready((out_a, out_b))

    assert out_a.shape == (N, Cout, 2 * H - 1, 2 * W - 1)
    assert out_b.shape == (N, Cout, 2 * H - 1, 2 * W - 1)
    err_a = jnp.max(jnp.abs(out_a - ref_a))
    err_b = jnp.max(jnp.abs(out_b - ref_b))
    assert jnp.allclose(out_a, ref_a, atol=5e-4, rtol=5e-4), f"max abs err {err_a}"
    assert jnp.allclose(out_b, ref_b, atol=5e-4, rtol=5e-4), f"max abs err {err_b}"

    print("KERNEL_OK")
</pallas_src>

<mosaic_0001>
module attributes {stable_mosaic.version = 11 : i64} {
  func.func @_convT3x3_kernel(%arg0: i32, %arg1: memref<2x4x256xbf16, #tpu.memory_space<vmem>>, %arg2: memref<32x4xbf16, #tpu.memory_space<vmem>>, %arg3: memref<16x4xbf16, #tpu.memory_space<vmem>>, %arg4: memref<16x4xbf16, #tpu.memory_space<vmem>>, %arg5: memref<8x4xbf16, #tpu.memory_space<vmem>>, %arg6: memref<8x1xf32, #tpu.memory_space<vmem>>, %arg7: memref<2x32x256xf32, #tpu.memory_space<vmem>>) attributes {dimension_semantics = [#tpu.dimension_semantics<parallel>], iteration_bounds = array<i64: 1>, scalar_prefetch = 0 : i64, scratch_operands = 0 : i64, tpu.core_type = #tpu.core_type<tc>, window_params = [{transform_indices = @transform_0, window_bounds = array<i64: 2, 4, 256>}, {pipeline_mode = #tpu.pipeline_mode<synchronous>, transform_indices = @transform_1, window_bounds = array<i64: 32, 4>}, {pipeline_mode = #tpu.pipeline_mode<synchronous>, transform_indices = @transform_2, window_bounds = array<i64: 16, 4>}, {pipeline_mode = #tpu.pipeline_mode<synchronous>, transform_indices = @transform_3, window_bounds = array<i64: 16, 4>}, {pipeline_mode = #tpu.pipeline_mode<synchronous>, transform_indices = @transform_4, window_bounds = array<i64: 8, 4>}, {pipeline_mode = #tpu.pipeline_mode<synchronous>, transform_indices = @transform_5, window_bounds = array<i64: 8, 1>}, {transform_indices = @transform_6, window_bounds = array<i64: 2, 32, 256>}]} {
    %c0 = arith.constant 0 : index
    %c0_0 = arith.constant 0 : index
    %0 = vector.load %arg2[%c0, %c0_0] : memref<32x4xbf16, #tpu.memory_space<vmem>>, vector<32x4xbf16>
    %c0_1 = arith.constant 0 : index
    %c0_2 = arith.constant 0 : index
    %1 = vector.load %arg3[%c0_1, %c0_2] : memref<16x4xbf16, #tpu.memory_space<vmem>>, vector<16x4xbf16>
    %c0_3 = arith.constant 0 : index
    %c0_4 = arith.constant 0 : index
    %2 = vector.load %arg4[%c0_3, %c0_4] : memref<16x4xbf16, #tpu.memory_space<vmem>>, vector<16x4xbf16>
    %c0_5 = arith.constant 0 : index
    %c0_6 = arith.constant 0 : index
    %3 = vector.load %arg5[%c0_5, %c0_6] : memref<8x4xbf16, #tpu.memory_space<vmem>>, vector<8x4xbf16>
    %c0_7 = arith.constant 0 : index
    %c0_8 = arith.constant 0 : index
    %4 = vector.load %arg6[%c0_7, %c0_8] : memref<8x1xf32, #tpu.memory_space<vmem>>, vector<8x1xf32>
    %c0_9 = arith.constant 0 : index
    %c0_10 = arith.constant 0 : index
    %c0_11 = arith.constant 0 : index
    %5 = vector.load %arg1[%c0_9, %c0_10, %c0_11] : memref<2x4x256xbf16, #tpu.memory_space<vmem>>, vector<1x4x256xbf16>
    %6 = vector.shape_cast %5 : vector<1x4x256xbf16> to vector<4x256xbf16>
    %7 = vector.extract_strided_slice %6 {offsets = [0, 1], sizes = [4, 255], strides = [1, 1]} : vector<4x256xbf16> to vector<4x255xbf16>
    %8 = vector.extract_strided_slice %6 {offsets = [0, 0], sizes = [4, 1], strides = [1, 1]} : vector<4x256xbf16> to vector<4x1xbf16>
    %9 = tpu.concatenate %7, %8 in 1 : vector<4x255xbf16>, vector<4x1xbf16> -> vector<4x256xbf16>
    %10 = vector.extract_strided_slice %6 {offsets = [0, 16], sizes = [4, 240], strides = [1, 1]} : vector<4x256xbf16> to vector<4x240xbf16>
    %11 = vector.extract_strided_slice %6 {offsets = [0, 0], sizes = [4, 16], strides = [1, 1]} : vector<4x256xbf16> to vector<4x16xbf16>
    %12 = tpu.concatenate %10, %11 in 1 : vector<4x240xbf16>, vector<4x16xbf16> -> vector<4x256xbf16>
    %13 = vector.extract_strided_slice %6 {offsets = [0, 17], sizes = [4, 239], strides = [1, 1]} : vector<4x256xbf16> to vector<4x239xbf16>
    %14 = vector.extract_strided_slice %6 {offsets = [0, 0], sizes = [4, 17], strides = [1, 1]} : vector<4x256xbf16> to vector<4x17xbf16>
    %15 = tpu.concatenate %13, %14 in 1 : vector<4x239xbf16>, vector<4x17xbf16> -> vector<4x256xbf16>
    %cst = arith.constant dense<0.000000e+00> : vector<32x256xf32>
    %16 = tpu.matmul %0, %6, %cst {dimension_numbers = #tpu.dot_dimension_numbers<[1], [0], [0], [1], [0, 0, 1, 1], [], []>} : vector<32x4xbf16>, vector<4x256xbf16>, vector<32x256xf32> -> vector<32x256xf32>
    %cst_12 = arith.constant dense<0.000000e+00> : vector<16x256xf32>
    %17 = tpu.matmul %1, %9, %cst_12 {dimension_numbers = #tpu.dot_dimension_numbers<[1], [0], [0], [1], [0, 0, 1, 1], [], []>} : vector<16x4xbf16>, vector<4x256xbf16>, vector<16x256xf32> -> vector<16x256xf32>
    %cst_13 = arith.constant dense<0.000000e+00> : vector<16x256xf32>
    %18 = tpu.matmul %2, %12, %cst_13 {dimension_numbers = #tpu.dot_dimension_numbers<[1], [0], [0], [1], [0, 0, 1, 1], [], []>} : vector<16x4xbf16>, vector<4x256xbf16>, vector<16x256xf32> -> vector<16x256xf32>
    %cst_14 = arith.constant dense<0.000000e+00> : vector<8x256xf32>
    %19 = tpu.matmul %3, %15, %cst_14 {dimension_numbers = #tpu.dot_dimension_numbers<[1], [0], [0], [1], [0, 0, 1, 1], [], []>} : vector<8x4xbf16>, vector<4x256xbf16>, vector<8x256xf32> -> vector<8x256xf32>
    %20 = vector.extract_strided_slice %16 {offsets = [0, 0], sizes = [8, 256], strides = [1, 1]} : vector<32x256xf32> to vector<8x256xf32>
    %21 = vector.broadcast %4 : vector<8x1xf32> to vector<8x256xf32>
    %22 = arith.addf %20, %21 : vector<8x256xf32>
    %c0_15 = arith.constant 0 : index
    %c0_16 = arith.constant 0 : index
    %c0_17 = arith.constant 0 : index
    %23 = vector.load %arg7[%c0_15, %c0_16, %c0_17] : memref<2x32x256xf32, #tpu.memory_space<vmem>>, vector<1x8x256xf32>
    %24 = vector.shape_cast %23 : vector<1x8x256xf32> to vector<8x256xf32>
    %25 = vector.shape_cast %22 : vector<8x256xf32> to vector<1x8x256xf32>
    tpu.vector_store %arg7[%c0_15, %c0_16, %c0_17], %25 {strides = array<i32>} : memref<2x32x256xf32, #tpu.memory_space<vmem>>, vector<1x8x256xf32>,
    %26 = vector.extract_strided_slice %16 {offsets = [8, 0], sizes = [8, 256], strides = [1, 1]} : vector<32x256xf32> to vector<8x256xf32>
    %27 = vector.extract_strided_slice %17 {offsets = [0, 0], sizes = [8, 256], strides = [1, 1]} : vector<16x256xf32> to vector<8x256xf32>
    %28 = arith.addf %26, %27 : vector<8x256xf32>
    %29 = vector.broadcast %4 : vector<8x1xf32> to vector<8x256xf32>
    %30 = arith.addf %28, %29 : vector<8x256xf32>
    %c0_18 = arith.constant 0 : index
    %c8 = arith.constant 8 : index
    %c0_19 = arith.constant 0 : index
    %31 = vector.load %arg7[%c0_18, %c8, %c0_19] : memref<2x32x256xf32, #tpu.memory_space<vmem>>, vector<1x8x256xf32>
    %32 = vector.shape_cast %31 : vector<1x8x256xf32> to vector<8x256xf32>
    %33 = vector.shape_cast %30 : vector<8x256xf32> to vector<1x8x256xf32>
    tpu.vector_store %arg7[%c0_18, %c8, %c0_19], %33 {strides = array<i32>} : memref<2x32x256xf32, #tpu.memory_space<vmem>>, vector<1x8x256xf32>,
    %34 = vector.extract_strided_slice %16 {offsets = [16, 0], sizes = [8, 256], strides = [1, 1]} : vector<32x256xf32> to vector<8x256xf32>
    %35 = vector.extract_strided_slice %18 {offsets = [0, 0], sizes = [8, 256], strides = [1, 1]} : vector<16x256xf32> to vector<8x256xf32>
    %36 = arith.addf %34, %35 : vector<8x256xf32>
    %37 = vector.broadcast %4 : vector<8x1xf32> to vector<8x256xf32>
    %38 = arith.addf %36, %37 : vector<8x256xf32>
    %c0_20 = arith.constant 0 : index
    %c16 = arith.constant 16 : index
    %c0_21 = arith.constant 0 : index
    %39 = vector.load %arg7[%c0_20, %c16, %c0_21] : memref<2x32x256xf32, #tpu.memory_space<vmem>>, vector<1x8x256xf32>
    %40 = vector.shape_cast %39 : vector<1x8x256xf32> to vector<8x256xf32>
    %41 = vector.shape_cast %38 : vector<8x256xf32> to vector<1x8x256xf32>
    tpu.vector_store %arg7[%c0_20, %c16, %c0_21], %41 {strides = array<i32>} : memref<2x32x256xf32, #tpu.memory_space<vmem>>, vector<1x8x256xf32>,
    %42 = vector.extract_strided_slice %16 {offsets = [24, 0], sizes = [8, 256], strides = [1, 1]} : vector<32x256xf32> to vector<8x256xf32>
    %43 = vector.extract_strided_slice %17 {offsets = [8, 0], sizes = [8, 256], strides = [1, 1]} : vector<16x256xf32> to vector<8x256xf32>
    %44 = arith.addf %42, %43 : vector<8x256xf32>
    %45 = vector.extract_strided_slice %18 {offsets = [8, 0], sizes = [8, 256], strides = [1, 1]} : vector<16x256xf32> to vector<8x256xf32>
    %46 = arith.addf %44, %45 : vector<8x256xf32>
    %47 = arith.addf %46, %19 : vector<8x256xf32>
    %48 = vector.broadcast %4 : vector<8x1xf32> to vector<8x256xf32>
    %49 = arith.addf %47, %48 : vector<8x256xf32>
    %c0_22 = arith.constant 0 : index
    %c24 = arith.constant 24 : index
    %c0_23 = arith.constant 0 : index
    %50 = vector.load %arg7[%c0_22, %c24, %c0_23] : memref<2x32x256xf32, #tpu.memory_space<vmem>>, vector<1x8x256xf32>
    %51 = vector.shape_cast %50 : vector<1x8x256xf32> to vector<8x256xf32>
    %52 = vector.shape_cast %49 : vector<8x256xf32> to vector<1x8x256xf32>
    tpu.vector_store %arg7[%c0_22, %c24, %c0_23], %52 {strides = array<i32>} : memref<2x32x256xf32, #tpu.memory_space<vmem>>, vector<1x8x256xf32>,
    %c1 = arith.constant 1 : index
    %c0_24 = arith.constant 0 : index
    %c0_25 = arith.constant 0 : index
    %53 = vector.load %arg1[%c1, %c0_24, %c0_25] : memref<2x4x256xbf16, #tpu.memory_space<vmem>>, vector<1x4x256xbf16>
    %54 = vector.shape_cast %53 : vector<1x4x256xbf16> to vector<4x256xbf16>
    %55 = vector.extract_strided_slice %54 {offsets = [0, 1], sizes = [4, 255], strides = [1, 1]} : vector<4x256xbf16> to vector<4x255xbf16>
    %56 = vector.extract_strided_slice %54 {offsets = [0, 0], sizes = [4, 1], strides = [1, 1]} : vector<4x256xbf16> to vector<4x1xbf16>
    %57 = tpu.concatenate %55, %56 in 1 : vector<4x255xbf16>, vector<4x1xbf16> -> vector<4x256xbf16>
    %58 = vector.extract_strided_slice %54 {offsets = [0, 16], sizes = [4, 240], strides = [1, 1]} : vector<4x256xbf16> to vector<4x240xbf16>
    %59 = vector.extract_strided_slice %54 {offsets = [0, 0], sizes = [4, 16], strides = [1, 1]} : vector<4x256xbf16> to vector<4x16xbf16>
    %60 = tpu.concatenate %58, %59 in 1 : vector<4x240xbf16>, vector<4x16xbf16> -> vector<4x256xbf16>
    %61 = vector.extract_strided_slice %54 {offsets = [0, 17], sizes = [4, 239], strides = [1, 1]} : vector<4x256xbf16> to vector<4x239xbf16>
    %62 = vector.extract_strided_slice %54 {offsets = [0, 0], sizes = [4, 17], strides = [1, 1]} : vector<4x256xbf16> to vector<4x17xbf16>
    %63 = tpu.concatenate %61, %62 in 1 : vector<4x239xbf16>, vector<4x17xbf16> -> vector<4x256xbf16>
    %cst_26 = arith.constant dense<0.000000e+00> : vector<32x256xf32>
    %64 = tpu.matmul %0, %54, %cst_26 {dimension_numbers = #tpu.dot_dimension_numbers<[1], [0], [0], [1], [0, 0, 1, 1], [], []>} : vector<32x4xbf16>, vector<4x256xbf16>, vector<32x256xf32> -> vector<32x256xf32>
    %cst_27 = arith.constant dense<0.000000e+00> : vector<16x256xf32>
    %65 = tpu.matmul %1, %57, %cst_27 {dimension_numbers = #tpu.dot_dimension_numbers<[1], [0], [0], [1], [0, 0, 1, 1], [], []>} : vector<16x4xbf16>, vector<4x256xbf16>, vector<16x256xf32> -> vector<16x256xf32>
    %cst_28 = arith.constant dense<0.000000e+00> : vector<16x256xf32>
    %66 = tpu.matmul %2, %60, %cst_28 {dimension_numbers = #tpu.dot_dimension_numbers<[1], [0], [0], [1], [0, 0, 1, 1], [], []>} : vector<16x4xbf16>, vector<4x256xbf16>, vector<16x256xf32> -> vector<16x256xf32>
    %cst_29 = arith.constant dense<0.000000e+00> : vector<8x256xf32>
    %67 = tpu.matmul %3, %63, %cst_29 {dimension_numbers = #tpu.dot_dimension_numbers<[1], [0], [0], [1], [0, 0, 1, 1], [], []>} : vector<8x4xbf16>, vector<4x256xbf16>, vector<8x256xf32> -> vector<8x256xf32>
    %68 = vector.extract_strided_slice %64 {offsets = [0, 0], sizes = [8, 256], strides = [1, 1]} : vector<32x256xf32> to vector<8x256xf32>
    %69 = vector.broadcast %4 : vector<8x1xf32> to vector<8x256xf32>
    %70 = arith.addf %68, %69 : vector<8x256xf32>
    %c1_30 = arith.constant 1 : index
    %c0_31 = arith.constant 0 : index
    %c0_32 = arith.constant 0 : index
    %71 = vector.load %arg7[%c1_30, %c0_31, %c0_32] : memref<2x32x256xf32, #tpu.memory_space<vmem>>, vector<1x8x256xf32>
    %72 = vector.shape_cast %71 : vector<1x8x256xf32> to vector<8x256xf32>
    %73 = vector.shape_cast %70 : vector<8x256xf32> to vector<1x8x256xf32>
    tpu.vector_store %arg7[%c1_30, %c0_31, %c0_32], %73 {strides = array<i32>} : memref<2x32x256xf32, #tpu.memory_space<vmem>>, vector<1x8x256xf32>,
    %74 = vector.extract_strided_slice %64 {offsets = [8, 0], sizes = [8, 256], strides = [1, 1]} : vector<32x256xf32> to vector<8x256xf32>
    %75 = vector.extract_strided_slice %65 {offsets = [0, 0], sizes = [8, 256], strides = [1, 1]} : vector<16x256xf32> to vector<8x256xf32>
    %76 = arith.addf %74, %75 : vector<8x256xf32>
    %77 = vector.broadcast %4 : vector<8x1xf32> to vector<8x256xf32>
    %78 = arith.addf %76, %77 : vector<8x256xf32>
    %c1_33 = arith.constant 1 : index
    %c8_34 = arith.constant 8 : index
    %c0_35 = arith.constant 0 : index
    %79 = vector.load %arg7[%c1_33, %c8_34, %c0_35] : memref<2x32x256xf32, #tpu.memory_space<vmem>>, vector<1x8x256xf32>
    %80 = vector.shape_cast %79 : vector<1x8x256xf32> to vector<8x256xf32>
    %81 = vector.shape_cast %78 : vector<8x256xf32> to vector<1x8x256xf32>
    tpu.vector_store %arg7[%c1_33, %c8_34, %c0_35], %81 {strides = array<i32>} : memref<2x32x256xf32, #tpu.memory_space<vmem>>, vector<1x8x256xf32>,
    %82 = vector.extract_strided_slice %64 {offsets = [16, 0], sizes = [8, 256], strides = [1, 1]} : vector<32x256xf32> to vector<8x256xf32>
    %83 = vector.extract_strided_slice %66 {offsets = [0, 0], sizes = [8, 256], strides = [1, 1]} : vector<16x256xf32> to vector<8x256xf32>
    %84 = arith.addf %82, %83 : vector<8x256xf32>
    %85 = vector.broadcast %4 : vector<8x1xf32> to vector<8x256xf32>
    %86 = arith.addf %84, %85 : vector<8x256xf32>
    %c1_36 = arith.constant 1 : index
    %c16_37 = arith.constant 16 : index
    %c0_38 = arith.constant 0 : index
    %87 = vector.load %arg7[%c1_36, %c16_37, %c0_38] : memref<2x32x256xf32, #tpu.memory_space<vmem>>, vector<1x8x256xf32>
    %88 = vector.shape_cast %87 : vector<1x8x256xf32> to vector<8x256xf32>
    %89 = vector.shape_cast %86 : vector<8x256xf32> to vector<1x8x256xf32>
    tpu.vector_store %arg7[%c1_36, %c16_37, %c0_38], %89 {strides = array<i32>} : memref<2x32x256xf32, #tpu.memory_space<vmem>>, vector<1x8x256xf32>,
    %90 = vector.extract_strided_slice %64 {offsets = [24, 0], sizes = [8, 256], strides = [1, 1]} : vector<32x256xf32> to vector<8x256xf32>
    %91 = vector.extract_strided_slice %65 {offsets = [8, 0], sizes = [8, 256], strides = [1, 1]} : vector<16x256xf32> to vector<8x256xf32>
    %92 = arith.addf %90, %91 : vector<8x256xf32>
    %93 = vector.extract_strided_slice %66 {offsets = [8, 0], sizes = [8, 256], strides = [1, 1]} : vector<16x256xf32> to vector<8x256xf32>
    %94 = arith.addf %92, %93 : vector<8x256xf32>
    %95 = arith.addf %94, %67 : vector<8x256xf32>
    %96 = vector.broadcast %4 : vector<8x1xf32> to vector<8x256xf32>
    %97 = arith.addf %95, %96 : vector<8x256xf32>
    %c1_39 = arith.constant 1 : index
    %c24_40 = arith.constant 24 : index
    %c0_41 = arith.constant 0 : index
    %98 = vector.load %arg7[%c1_39, %c24_40, %c0_41] : memref<2x32x256xf32, #tpu.memory_space<vmem>>, vector<1x8x256xf32>
    %99 = vector.shape_cast %98 : vector<1x8x256xf32> to vector<8x256xf32>
    %100 = vector.shape_cast %97 : vector<8x256xf32> to vector<1x8x256xf32>
    tpu.vector_store %arg7[%c1_39, %c24_40, %c0_41], %100 {strides = array<i32>} : memref<2x32x256xf32, #tpu.memory_space<vmem>>, vector<1x8x256xf32>,
    return
  }
  func.func @transform_0(%arg0: i32) -> (i32, i32, i32) {
    %c0_i32 = arith.constant 0 : i32
    %c0_i32_0 = arith.constant 0 : i32
    %c0_i32_1 = arith.constant 0 : i32
    return %arg0, %c0_i32, %c0_i32_0 : i32, i32, i32
  }
  func.func @transform_1(%arg0: i32) -> (i32, i32) {
    %c0_i32 = arith.constant 0 : i32
    %c0_i32_0 = arith.constant 0 : i32
    %c0_i32_1 = arith.constant 0 : i32
    return %c0_i32, %c0_i32_0 : i32, i32
  }
  func.func @transform_2(%arg0: i32) -> (i32, i32) {
    %c0_i32 = arith.constant 0 : i32
    %c0_i32_0 = arith.constant 0 : i32
    %c0_i32_1 = arith.constant 0 : i32
    return %c0_i32, %c0_i32_0 : i32, i32
  }
  func.func @transform_3(%arg0: i32) -> (i32, i32) {
    %c0_i32 = arith.constant 0 : i32
    %c0_i32_0 = arith.constant 0 : i32
    %c0_i32_1 = arith.constant 0 : i32
    return %c0_i32, %c0_i32_0 : i32, i32
  }
  func.func @transform_4(%arg0: i32) -> (i32, i32) {
    %c0_i32 = arith.constant 0 : i32
    %c0_i32_0 = arith.constant 0 : i32
    %c0_i32_1 = arith.constant 0 : i32
    return %c0_i32, %c0_i32_0 : i32, i32
  }
  func.func @transform_5(%arg0: i32) -> (i32, i32) {
    %c0_i32 = arith.constant 0 : i32
    %c0_i32_0 = arith.constant 0 : i32
    %c0_i32_1 = arith.constant 0 : i32
    return %c0_i32, %c0_i32_0 : i32, i32
  }
  func.func @transform_6(%arg0: i32) -> (i32, i32, i32) {
    %c0_i32 = arith.constant 0 : i32
    %c0_i32_0 = arith.constant 0 : i32
    %c0_i32_1 = arith.constant 0 : i32
    return %arg0, %c0_i32, %c0_i32_0 : i32, i32, i32
  }
}

</mosaic_0001>

<llo_original>
// kernel: tpu_custom_call.1
$region0: #{tpu_custom_call.1}
  #allocation0 [shape = 'u32[]', space=smem, size = 0x4, offset = 0x4, fixed_abs, tag = 'smem constant byte address 0x4 - core index']
  #allocation1 [shape = 'u32[144,128]{1,0:T(1,128)}', space=vmem, size = 0x12000, scoped, tag = 'internal scratch']
  %s0 = inlined_call_operand.vmem [shape: bf16[2,4,256], index: 0, kind: input, shape index: {}]
  %s1 = inlined_call_operand.vmem [shape: bf16[32,4], index: 1, kind: input, shape index: {}]
  %s2 = inlined_call_operand.vmem [shape: bf16[16,4], index: 2, kind: input, shape index: {}]
  %s3 = inlined_call_operand.vmem [shape: bf16[16,4], index: 3, kind: input, shape index: {}]
  %s4 = inlined_call_operand.vmem [shape: bf16[8,4], index: 4, kind: input, shape index: {}]
  %s5 = inlined_call_operand.vmem [shape: f32[8,1], index: 5, kind: input, shape index: {}]
  %s6 = inlined_call_operand.hbm [shape: f32[2,32,256], index: 6, kind: output, shape index: {}]
  %s7 = sld [smem:[#allocation0]]
  $region34: #{tpu_custom_call.1} parent=0
    _
  %s9 = ssub.s32 1, %s7
  %s10 = scalar_select 0, %s9, %s7
  $region1: #{tpu_custom_call.1} parent=0
    #allocation2 [shape = 'u8[65536]{0}', space=vmem, size = 0x10000, scoped, tag = 'output window, operand 0, single buffered']
    #allocation3 [shape = 's32[1]{0}', space=sflag, size = 0x4, scoped, tag = 'scoped memory for tpu_custom_call.1']
    %11 = vsyncpa [#allocation3], 0
    // Predicated region
    $region2: #{tpu_custom_call.1} parent=1 // pred_check
      _
    $region3: #{tpu_custom_call.1} parent=1 // pred_check_branch
      %13 = sbr.rel (0) target = $region5
    $region4: #{tpu_custom_call.1} parent=1 // pred_region
      _
    $region5: #{tpu_custom_call.1} parent=1 // pred_fallthru
      _
    // Predicated region
    $region6: #{tpu_custom_call.1} parent=1 // pred_check
      _
    $region7: #{tpu_custom_call.1} parent=1 // pred_check_branch
      %15 = sbr.rel (0) target = $region9
    $region8: #{tpu_custom_call.1} parent=1 // pred_region
      _
    $region9: #{tpu_custom_call.1} parent=1 // pred_fallthru
      _
    // Predicated region
    $region10: #{tpu_custom_call.1} parent=1 // pred_check
      _
    $region11: #{tpu_custom_call.1} parent=1 // pred_check_branch
      %17 = sbr.rel (0) target = $region13
    $region12: #{tpu_custom_call.1} parent=1 // pred_region
      _
    $region13: #{tpu_custom_call.1} parent=1 // pred_fallthru
      _
    // Predicated region
    $region14: #{tpu_custom_call.1} parent=1 // pred_check
      _
    $region15: #{tpu_custom_call.1} parent=1 // pred_check_branch
      %19 = sbr.rel (0) target = $region17
    $region16: #{tpu_custom_call.1} parent=1 // pred_region
      _
    $region17: #{tpu_custom_call.1} parent=1 // pred_fallthru
      _
    // Predicated region
    $region18: #{tpu_custom_call.1} parent=1 // pred_check
      _
    $region19: #{tpu_custom_call.1} parent=1 // pred_check_branch
      %21 = sbr.rel (0) target = $region21
    $region20: #{tpu_custom_call.1} parent=1 // pred_region
      _
    $region21: #{tpu_custom_call.1} parent=1 // pred_fallthru
      _
    // Predicated region
    $region22: #{tpu_custom_call.1} parent=1 // pred_check
      _
    $region23: #{tpu_custom_call.1} parent=1 // pred_check_branch
      %23 = sbr.rel (0) target = $region25
    $region24: #{tpu_custom_call.1} parent=1 // pred_region
      _
    $region25: #{tpu_custom_call.1} parent=1 // pred_fallthru
      _
    %v25 = vld [vmem:[%s1] sm:$0xf]
    %v26 = vld [vmem:[%s1 + $0x4] sm:$0xf]
    %v27 = vld [vmem:[%s1 + $0x8] sm:$0xf]
    %v28 = vld [vmem:[%s1 + $0xc] sm:$0xf]
    %v29 = vld [vmem:[%s2] sm:$0xf]
    %v30 = vld [vmem:[%s2 + $0x4] sm:$0xf]
    %v31 = vld [vmem:[%s3] sm:$0xf]
    %v32 = vld [vmem:[%s3 + $0x4] sm:$0xf]
    %v33 = vld [vmem:[%s4] sm:$0xf]
    %v34 = vld [vmem:[%s5] sm:$0xff]
    %v35 = vld [vmem:[%s0] sm:$0xf]
    %v38 = vunpack.c.l.s4 1983009808
    %v39 = vunpack.c.0.s8 %v38
    %v40 = vlaneseq
    %v41 = vshrl.u32 %v40, 7
    %v42 = vsub.s32 %v39, %v41
    %v43 = vrot.slane %v35, %v42
    %v44 = vcombine.high %v43, %v43
    %45 = vrot.lane.b32.xlu0 %v43, 127
    %v46 = vpop.permute.xlu0 %45
    %47 = vrot.lane.b32.xlu0 %v44, 127
    %v48 = vpop.permute.xlu0 %47
    %vm49 = vcmask 1039360
    %v50 = vsel %vm49, %v46, %v48
    %vm51 = vcmask 1039360
    %v54 = vsel %vm51, %v48, %v46
    %55 = vrot.lane.b32.xlu0 %v43, 112
    %v56 = vpop.permute.xlu0 %55
    %57 = vrot.lane.b32.xlu0 %v44, 112
    %v58 = vpop.permute.xlu0 %57
    %vm59 = vcmask 916480
    %v60 = vsel %vm59, %v56, %v58
    %vm61 = vcmask 916480
    %v64 = vsel %vm61, %v58, %v56
    %65 = vrot.lane.b32.xlu0 %v43, 111
    %v66 = vpop.permute.xlu0 %65
    %67 = vrot.lane.b32.xlu0 %v44, 111
    %v68 = vpop.permute.xlu0 %67
    %vm69 = vcmask 908288
    %v70 = vsel %vm69, %v66, %v68
    %vm71 = vcmask 908288
    %v74 = vsel %vm71, %v68, %v66
    %v79 = vunpack.c.l.b16 %v25
    %v80 = vunpack.c.l.b16 %v26
    %v81 = vunpack.c.l.b16 %v27
    %v82 = vunpack.c.l.b16 %v28
    %v83 = vpack.c.b16 %v80, %v79
    %v84 = vpack.c.b16 %v82, %v81
    %vm85 = vcmask 31744
    %v87 = vsel %vm85, %v83, 0
    %v90 = vsel %vm85, %v84, 0
    %vm92 = vcmask 1041408
    %v94 = vsel %vm92, %v43, 0
    %v97 = vsel %vm92, %v44, 0
    %99 = vmatprep.subr.bf16.mxu0 %v97
    %100 = vmatpush1.bf16.msra.mxu0 %v94
    %101 = vmatprep.subr.bf16.mxu0 0
    %102 = vmatpush1.bf16.msra.mxu0 0
    %103 = vmatprep.subr.bf16.mxu0 0
    %104 = vmatpush1.bf16.msra.mxu0 0
    %105 = vmatprep.subr.bf16.mxu0 0
    %106 = vmatpush1.bf16.msra.mxu0 0
    %107 = vmatprep.subr.bf16.mxu0 0
    %108 = vmatpush1.bf16.msra.mxu0 0
    %109 = vmatprep.subr.bf16.mxu0 0
    %110 = vmatpush1.bf16.msra.mxu0 0
    %111 = vmatprep.subr.bf16.mxu0 0
    %112 = vmatpush1.bf16.msra.mxu0 0
    %113 = vmatprep.subr.bf16.mxu0 0
    %114 = vmatpush1.bf16.msra.mxu0 0
    %115 = vmatprep.subr.bf16.mxu0 0
    %116 = vmatpush1.bf16.msra.mxu0 0
    %117 = vmatprep.subr.bf16.mxu0 0
    %118 = vmatpush1.bf16.msra.mxu0 0
    %119 = vmatprep.subr.bf16.mxu0 0
    %120 = vmatpush1.bf16.msra.mxu0 0
    %121 = vmatprep.subr.bf16.mxu0 0
    %122 = vmatpush1.bf16.msra.mxu0 0
    %123 = vmatprep.subr.bf16.mxu0 0
    %124 = vmatpush1.bf16.msra.mxu0 0
    %125 = vmatprep.subr.bf16.mxu0 0
    %126 = vmatpush1.bf16.msra.mxu0 0
    %127 = vmatprep.subr.bf16.mxu0 0
    %128 = vmatpush1.bf16.msra.mxu0 0
    %129 = vmatprep.subr.bf16.mxu0 0
    %130 = vmatpush1.bf16.msra.mxu0 0
    %131 = vmatprep.mubr.bf16.mxu0 0
    %132 = vmatmul.mubr.bf16.gmra.mrb[0].mxu0 %v87
    %v133 = vpop.f32.mrb[0].mxu0
    %v134 = vadd.f32 0.0, %v133
    %v135 = vpop.f32.mrb[0].mxu0
    %v136 = vadd.f32 0.0, %v135
    %v137 = vpop.f32.mrb[0].mxu0
    %v138 = vadd.f32 0.0, %v137
    %v139 = vpop.f32.mrb[0].mxu0
    %v140 = vadd.f32 0.0, %v139
    %141 = vmatprep.mubr.bf16.mxu0 0
    %142 = vmatmul.mubr.bf16.gmra.mrb[0].mxu0 %v90
    %v143 = vpop.f32.mrb[0].mxu0
    %v144 = vadd.f32 0.0, %v143
    %v145 = vpop.f32.mrb[0].mxu0
    %v146 = vadd.f32 0.0, %v145
    %v147 = vpop.f32.mrb[0].mxu0
    %v148 = vadd.f32 0.0, %v147
    %v149 = vpop.f32.mrb[0].mxu0
    %v150 = vadd.f32 0.0, %v149
    %151 = vdwg.mxu0
    %v154 = vunpack.c.l.b16 %v29
    %v155 = vunpack.c.l.b16 %v30
    %v156 = vpack.c.b16 %v155, %v154
    %v158 = vsel %vm85, %v156, 0
    %v161 = vsel %vm92, %v50, 0
    %v163 = vsel %vm92, %v54, 0
    %165 = vmatprep.subr.bf16.mxu0 %v163
    %166 = vmatpush1.bf16.msra.mxu0 %v161
    %167 = vmatprep.subr.bf16.mxu0 0
    %168 = vmatpush1.bf16.msra.mxu0 0
    %169 = vmatprep.subr.bf16.mxu0 0
    %170 = vmatpush1.bf16.msra.mxu0 0
    %171 = vmatprep.subr.bf16.mxu0 0
    %172 = vmatpush1.bf16.msra.mxu0 0
    %173 = vmatprep.subr.bf16.mxu0 0
    %174 = vmatpush1.bf16.msra.mxu0 0
    %175 = vmatprep.subr.bf16.mxu0 0
    %176 = vmatpush1.bf16.msra.mxu0 0
    %177 = vmatprep.subr.bf16.mxu0 0
    %178 = vmatpush1.bf16.msra.mxu0 0
    %179 = vmatprep.subr.bf16.mxu0 0
    %180 = vmatpush1.bf16.msra.mxu0 0
    %181 = vmatprep.subr.bf16.mxu0 0
    %182 = vmatpush1.bf16.msra.mxu0 0
    %183 = vmatprep.subr.bf16.mxu0 0
    %184 = vmatpush1.bf16.msra.mxu0 0
    %185 = vmatprep.subr.bf16.mxu0 0
    %186 = vmatpush1.bf16.msra.mxu0 0
    %187 = vmatprep.subr.bf16.mxu0 0
    %188 = vmatpush1.bf16.msra.mxu0 0
    %189 = vmatprep.subr.bf16.mxu0 0
    %190 = vmatpush1.bf16.msra.mxu0 0
    %191 = vmatprep.subr.bf16.mxu0 0
    %192 = vmatpush1.bf16.msra.mxu0 0
    %193 = vmatprep.subr.bf16.mxu0 0
    %194 = vmatpush1.bf16.msra.mxu0 0
    %195 = vmatprep.subr.bf16.mxu0 0
    %196 = vmatpush1.bf16.msra.mxu0 0
    %197 = vmatprep.mubr.bf16.mxu0 0
    %198 = vmatmul.mubr.bf16.gmra.mrb[0].mxu0 %v158
    %v199 = vpop.f32.mrb[0].mxu0
    %v200 = vadd.f32 0.0, %v199
    %v201 = vpop.f32.mrb[0].mxu0
    %v202 = vadd.f32 0.0, %v201
    %v203 = vpop.f32.mrb[0].mxu0
    %v204 = vadd.f32 0.0, %v203
    %v205 = vpop.f32.mrb[0].mxu0
    %v206 = vadd.f32 0.0, %v205
    %207 = vdwg.mxu0
    %v210 = vunpack.c.l.b16 %v31
    %v211 = vunpack.c.l.b16 %v32
    %v212 = vpack.c.b16 %v211, %v210
    %v214 = vsel %vm85, %v212, 0
    %v217 = vsel %vm92, %v60, 0
    %v219 = vsel %vm92, %v64, 0
    %221 = vmatprep.subr.bf16.mxu0 %v219
    %222 = vmatpush1.bf16.msra.mxu0 %v217
    %223 = vmatprep.subr.bf16.mxu0 0
    %224 = vmatpush1.bf16.msra.mxu0 0
    %225 = vmatprep.subr.bf16.mxu0 0
    %226 = vmatpush1.bf16.msra.mxu0 0
    %227 = vmatprep.subr.bf16.mxu0 0
    %228 = vmatpush1.bf16.msra.mxu0 0
    %229 = vmatprep.subr.bf16.mxu0 0
    %230 = vmatpush1.bf16.msra.mxu0 0
    %231 = vmatprep.subr.bf16.mxu0 0
    %232 = vmatpush1.bf16.msra.mxu0 0
    %233 = vmatprep.subr.bf16.mxu0 0
    %234 = vmatpush1.bf16.msra.mxu0 0
    %235 = vmatprep.subr.bf16.mxu0 0
    %236 = vmatpush1.bf16.msra.mxu0 0
    %237 = vmatprep.subr.bf16.mxu0 0
    %238 = vmatpush1.bf16.msra.mxu0 0
    %239 = vmatprep.subr.bf16.mxu0 0
    %240 = vmatpush1.bf16.msra.mxu0 0
    %241 = vmatprep.subr.bf16.mxu0 0
    %242 = vmatpush1.bf16.msra.mxu0 0
    %243 = vmatprep.subr.bf16.mxu0 0
    %244 = vmatpush1.bf16.msra.mxu0 0
    %245 = vmatprep.subr.bf16.mxu0 0
    %246 = vmatpush1.bf16.msra.mxu0 0
    %247 = vmatprep.subr.bf16.mxu0 0
    %248 = vmatpush1.bf16.msra.mxu0 0
    %249 = vmatprep.subr.bf16.mxu0 0
    %250 = vmatpush1.bf16.msra.mxu0 0
    %251 = vmatprep.subr.bf16.mxu0 0
    %252 = vmatpush1.bf16.msra.mxu0 0
    %253 = vmatprep.mubr.bf16.mxu0 0
    %254 = vmatmul.mubr.bf16.gmra.mrb[0].mxu0 %v214
    %v255 = vpop.f32.mrb[0].mxu0
    %v256 = vadd.f32 0.0, %v255
    %v257 = vpop.f32.mrb[0].mxu0
    %v258 = vadd.f32 0.0, %v257
    %v259 = vpop.f32.mrb[0].mxu0
    %v260 = vadd.f32 0.0, %v259
    %v261 = vpop.f32.mrb[0].mxu0
    %v262 = vadd.f32 0.0, %v261
    %263 = vdwg.mxu0
    %v265 = vsel %vm85, %v33, 0
    %v268 = vsel %vm92, %v70, 0
    %v270 = vsel %vm92, %v74, 0
    %272 = vmatprep.subr.bf16.mxu0 %v270
    %273 = vmatpush1.bf16.msra.mxu0 %v268
    %274 = vmatprep.subr.bf16.mxu0 0
    %275 = vmatpush1.bf16.msra.mxu0 0
    %276 = vmatprep.subr.bf16.mxu0 0
    %277 = vmatpush1.bf16.msra.mxu0 0
    %278 = vmatprep.subr.bf16.mxu0 0
    %279 = vmatpush1.bf16.msra.mxu0 0
    %280 = vmatprep.subr.bf16.mxu0 0
    %281 = vmatpush1.bf16.msra.mxu0 0
    %282 = vmatprep.subr.bf16.mxu0 0
    %283 = vmatpush1.bf16.msra.mxu0 0
    %284 = vmatprep.subr.bf16.mxu0 0
    %285 = vmatpush1.bf16.msra.mxu0 0
    %286 = vmatprep.subr.bf16.mxu0 0
    %287 = vmatpush1.bf16.msra.mxu0 0
    %288 = vmatprep.subr.bf16.mxu0 0
    %289 = vmatpush1.bf16.msra.mxu0 0
    %290 = vmatprep.subr.bf16.mxu0 0
    %291 = vmatpush1.bf16.msra.mxu0 0
    %292 = vmatprep.subr.bf16.mxu0 0
    %293 = vmatpush1.bf16.msra.mxu0 0
    %294 = vmatprep.subr.bf16.mxu0 0
    %295 = vmatpush1.bf16.msra.mxu0 0
    %296 = vmatprep.subr.bf16.mxu0 0
    %297 = vmatpush1.bf16.msra.mxu0 0
    %298 = vmatprep.subr.bf16.mxu0 0
    %299 = vmatpush1.bf16.msra.mxu0 0
    %300 = vmatprep.subr.bf16.mxu0 0
    %301 = vmatpush1.bf16.msra.mxu0 0
    %302 = vmatprep.subr.bf16.mxu0 0
    %303 = vmatpush1.bf16.msra.mxu0 0
    %304 = vmatprep.mubr.bf16.mxu0 0
    %305 = vmatmul.mubr.bf16.gmra.mrb[0].mxu0 %v265
    %v306 = vpop.f32.mrb[0].mxu0
    %v307 = vadd.f32 0.0, %v306
    %v308 = vpop.f32.mrb[0].mxu0
    %v309 = vadd.f32 0.0, %v308
    %v310 = vpop.f32.mrb[0].mxu0
    %v311 = vpop.f32.mrb[0].mxu0
    %312 = vdwg.mxu0
    %314 = vset.pattern.permute.xlu0 0
    %315 = vperm.xlu0 %314, %v34
    %v316 = vpop.permute.xlu0 %315
    %v318 = vadd.f32 %v134, %v316
    %v319 = vadd.f32 %v136, %v316
    %320 = vst [vmem:[#allocation2] sm:$0xff] %v318
    %321 = vst [vmem:[#allocation2 + $0x8] sm:$0xff] %v319
    %v322 = vadd.f32 %v138, %v200
    %v323 = vadd.f32 %v140, %v202
    %v324 = vadd.f32 %v322, %v316
    %v325 = vadd.f32 %v323, %v316
    %326 = vst [vmem:[#allocation2 + $0x10] sm:$0xff] %v324
    %327 = vst [vmem:[#allocation2 + $0x18] sm:$0xff] %v325
    %v328 = vadd.f32 %v144, %v256
    %v329 = vadd.f32 %v146, %v258
    %v330 = vadd.f32 %v328, %v316
    %v331 = vadd.f32 %v329, %v316
    %332 = vst [vmem:[#allocation2 + $0x20] sm:$0xff] %v330
    %333 = vst [vmem:[#allocation2 + $0x28] sm:$0xff] %v331
    %v334 = vadd.f32 %v148, %v204
    %v335 = vadd.f32 %v150, %v206
    %v336 = vadd.f32 %v334, %v260
    %v337 = vadd.f32 %v335, %v262
    %v338 = vadd.f32 %v336, %v307
    %v339 = vadd.f32 %v337, %v309
    %v340 = vadd.f32 %v338, %v316
    %v341 = vadd.f32 %v339, %v316
    %342 = vst [vmem:[#allocation2 + $0x30] sm:$0xff] %v340
    %343 = vst [vmem:[#allocation2 + $0x38] sm:$0xff] %v341
    %s344 = scalar_lea.vmem %s0, 4
    %v345 = vld [vmem:[%s344] sm:$0xf]
    %v348 = vunpack.c.l.s4 1983009808
    %v349 = vunpack.c.0.s8 %v348
    %v350 = vlaneseq
    %v351 = vshrl.u32 %v350, 7
    %v352 = vsub.s32 %v349, %v351
    %v353 = vrot.slane %v345, %v352
    %v354 = vcombine.high %v353, %v353
    %355 = vrot.lane.b32.xlu0 %v353, 127
    %v356 = vpop.permute.xlu0 %355
    %357 = vrot.lane.b32.xlu0 %v354, 127
    %v358 = vpop.permute.xlu0 %357
    %v359 = vsel %vm49, %v356, %v358
    %v362 = vsel %vm51, %v358, %v356
    %363 = vrot.lane.b32.xlu0 %v353, 112
    %v364 = vpop.permute.xlu0 %363
    %365 = vrot.lane.b32.xlu0 %v354, 112
    %v366 = vpop.permute.xlu0 %365
    %v367 = vsel %vm59, %v364, %v366
    %v370 = vsel %vm61, %v366, %v364
    %371 = vrot.lane.b32.xlu0 %v353, 111
    %v372 = vpop.permute.xlu0 %371
    %373 = vrot.lane.b32.xlu0 %v354, 111
    %v374 = vpop.permute.xlu0 %373
    %v375 = vsel %vm69, %v372, %v374
    %v378 = vsel %vm71, %v374, %v372
    %v380 = vsel %vm92, %v353, 0
    %v383 = vsel %vm92, %v354, 0
    %385 = vmatprep.subr.bf16.mxu0 %v383
    %386 = vmatpush1.bf16.msra.mxu0 %v380
    %387 = vmatprep.subr.bf16.mxu0 0
    %388 = vmatpush1.bf16.msra.mxu0 0
    %389 = vmatprep.subr.bf16.mxu0 0
    %390 = vmatpush1.bf16.msra.mxu0 0
    %391 = vmatprep.subr.bf16.mxu0 0
    %392 = vmatpush1.bf16.msra.mxu0 0
    %393 = vmatprep.subr.bf16.mxu0 0
    %394 = vmatpush1.bf16.msra.mxu0 0
    %395 = vmatprep.subr.bf16.mxu0 0
    %396 = vmatpush1.bf16.msra.mxu0 0
    %397 = vmatprep.subr.bf16.mxu0 0
    %398 = vmatpush1.bf16.msra.mxu0 0
    %399 = vmatprep.subr.bf16.mxu0 0
    %400 = vmatpush1.bf16.msra.mxu0 0
    %401 = vmatprep.subr.bf16.mxu0 0
    %402 = vmatpush1.bf16.msra.mxu0 0
    %403 = vmatprep.subr.bf16.mxu0 0
    %404 = vmatpush1.bf16.msra.mxu0 0
    %405 = vmatprep.subr.bf16.mxu0 0
    %406 = vmatpush1.bf16.msra.mxu0 0
    %407 = vmatprep.subr.bf16.mxu0 0
    %408 = vmatpush1.bf16.msra.mxu0 0
    %409 = vmatprep.subr.bf16.mxu0 0
    %410 = vmatpush1.bf16.msra.mxu0 0
    %411 = vmatprep.subr.bf16.mxu0 0
    %412 = vmatpush1.bf16.msra.mxu0 0
    %413 = vmatprep.subr.bf16.mxu0 0
    %414 = vmatpush1.bf16.msra.mxu0 0
    %415 = vmatprep.subr.bf16.mxu0 0
    %416 = vmatpush1.bf16.msra.mxu0 0
    %417 = vmatprep.mubr.bf16.mxu0 0
    %418 = vmatmul.mubr.bf16.gmra.mrb[0].mxu0 %v87
    %v419 = vpop.f32.mrb[0].mxu0
    %v420 = vadd.f32 0.0, %v419
    %v421 = vpop.f32.mrb[0].mxu0
    %v422 = vadd.f32 0.0, %v421
    %v423 = vpop.f32.mrb[0].mxu0
    %v424 = vadd.f32 0.0, %v423
    %v425 = vpop.f32.mrb[0].mxu0
    %v426 = vadd.f32 0.0, %v425
    %427 = vmatprep.mubr.bf16.mxu0 0
    %428 = vmatmul.mubr.bf16.gmra.mrb[0].mxu0 %v90
    %v429 = vpop.f32.mrb[0].mxu0
    %v430 = vadd.f32 0.0, %v429
    %v431 = vpop.f32.mrb[0].mxu0
    %v432 = vadd.f32 0.0, %v431
    %v433 = vpop.f32.mrb[0].mxu0
    %v434 = vadd.f32 0.0, %v433
    %v435 = vpop.f32.mrb[0].mxu0
    %v436 = vadd.f32 0.0, %v435
    %437 = vdwg.mxu0
    %v439 = vsel %vm92, %v359, 0
    %v441 = vsel %vm92, %v362, 0
    %443 = vmatprep.subr.bf16.mxu0 %v441
    %444 = vmatpush1.bf16.msra.mxu0 %v439
    %445 = vmatprep.subr.bf16.mxu0 0
    %446 = vmatpush1.bf16.msra.mxu0 0
    %447 = vmatprep.subr.bf16.mxu0 0
    %448 = vmatpush1.bf16.msra.mxu0 0
    %449 = vmatprep.subr.bf16.mxu0 0
    %450 = vmatpush1.bf16.msra.mxu0 0
    %451 = vmatprep.subr.bf16.mxu0 0
    %452 = vmatpush1.bf16.msra.mxu0 0
    %453 = vmatprep.subr.bf16.mxu0 0
    %454 = vmatpush1.bf16.msra.mxu0 0
    %455 = vmatprep.subr.bf16.mxu0 0
    %456 = vmatpush1.bf16.msra.mxu0 0
    %457 = vmatprep.subr.bf16.mxu0 0
    %458 = vmatpush1.bf16.msra.mxu0 0
    %459 = vmatprep.subr.bf16.mxu0 0
    %460 = vmatpush1.bf16.msra.mxu0 0
    %461 = vmatprep.subr.bf16.mxu0 0
    %462 = vmatpush1.bf16.msra.mxu0 0
    %463 = vmatprep.subr.bf16.mxu0 0
    %464 = vmatpush1.bf16.msra.mxu0 0
    %465 = vmatprep.subr.bf16.mxu0 0
    %466 = vmatpush1.bf16.msra.mxu0 0
    %467 = vmatprep.subr.bf16.mxu0 0
    %468 = vmatpush1.bf16.msra.mxu0 0
    %469 = vmatprep.subr.bf16.mxu0 0
    %470 = vmatpush1.bf16.msra.mxu0 0
    %471 = vmatprep.subr.bf16.mxu0 0
    %472 = vmatpush1.bf16.msra.mxu0 0
    %473 = vmatprep.subr.bf16.mxu0 0
    %474 = vmatpush1.bf16.msra.mxu0 0
    %475 = vmatprep.mubr.bf16.mxu0 0
    %476 = vmatmul.mubr.bf16.gmra.mrb[0].mxu0 %v158
    %v477 = vpop.f32.mrb[0].mxu0
    %v478 = vadd.f32 0.0, %v477
    %v479 = vpop.f32.mrb[0].mxu0
    %v480 = vadd.f32 0.0, %v479
    %v481 = vpop.f32.mrb[0].mxu0
    %v482 = vadd.f32 0.0, %v481
    %v483 = vpop.f32.mrb[0].mxu0
    %v484 = vadd.f32 0.0, %v483
    %485 = vdwg.mxu0
    %v487 = vsel %vm92, %v367, 0
    %v489 = vsel %vm92, %v370, 0
    %491 = vmatprep.subr.bf16.mxu0 %v489
    %492 = vmatpush1.bf16.msra.mxu0 %v487
    %493 = vmatprep.subr.bf16.mxu0 0
    %494 = vmatpush1.bf16.msra.mxu0 0
    %495 = vmatprep.subr.bf16.mxu0 0
    %496 = vmatpush1.bf16.msra.mxu0 0
    %497 = vmatprep.subr.bf16.mxu0 0
    %498 = vmatpush1.bf16.msra.mxu0 0
    %499 = vmatprep.subr.bf16.mxu0 0
    %500 = vmatpush1.bf16.msra.mxu0 0
    %501 = vmatprep.subr.bf16.mxu0 0
    %502 = vmatpush1.bf16.msra.mxu0 0
    %503 = vmatprep.subr.bf16.mxu0 0
    %504 = vmatpush1.bf16.msra.mxu0 0
    %505 = vmatprep.subr.bf16.mxu0 0
    %506 = vmatpush1.bf16.msra.mxu0 0
    %507 = vmatprep.subr.bf16.mxu0 0
    %508 = vmatpush1.bf16.msra.mxu0 0
    %509 = vmatprep.subr.bf16.mxu0 0
    %510 = vmatpush1.bf16.msra.mxu0 0
    %511 = vmatprep.subr.bf16.mxu0 0
    %512 = vmatpush1.bf16.msra.mxu0 0
    %513 = vmatprep.subr.bf16.mxu0 0
    %514 = vmatpush1.bf16.msra.mxu0 0
    %515 = vmatprep.subr.bf16.mxu0 0
    %516 = vmatpush1.bf16.msra.mxu0 0
    %517 = vmatprep.subr.bf16.mxu0 0
    %518 = vmatpush1.bf16.msra.mxu0 0
    %519 = vmatprep.subr.bf16.mxu0 0
    %520 = vmatpush1.bf16.msra.mxu0 0
    %521 = vmatprep.subr.bf16.mxu0 0
    %522 = vmatpush1.bf16.msra.mxu0 0
    %523 = vmatprep.mubr.bf16.mxu0 0
    %524 = vmatmul.mubr.bf16.gmra.mrb[0].mxu0 %v214
    %v525 = vpop.f32.mrb[0].mxu0
    %v526 = vadd.f32 0.0, %v525
    %v527 = vpop.f32.mrb[0].mxu0
    %v528 = vadd.f32 0.0, %v527
    %v529 = vpop.f32.mrb[0].mxu0
    %v530 = vadd.f32 0.0, %v529
    %v531 = vpop.f32.mrb[0].mxu0
    %v532 = vadd.f32 0.0, %v531
    %533 = vdwg.mxu0
    %v535 = vsel %vm92, %v375, 0
    %v537 = vsel %vm92, %v378, 0
    %539 = vmatprep.subr.bf16.mxu0 %v537
    %540 = vmatpush1.bf16.msra.mxu0 %v535
    %541 = vmatprep.subr.bf16.mxu0 0
    %542 = vmatpush1.bf16.msra.mxu0 0
    %543 = vmatprep.subr.bf16.mxu0 0
    %544 = vmatpush1.bf16.msra.mxu0 0
    %545 = vmatprep.subr.bf16.mxu0 0
    %546 = vmatpush1.bf16.msra.mxu0 0
    %547 = vmatprep.subr.bf16.mxu0 0
    %548 = vmatpush1.bf16.msra.mxu0 0
    %549 = vmatprep.subr.bf16.mxu0 0
    %550 = vmatpush1.bf16.msra.mxu0 0
    %551 = vmatprep.subr.bf16.mxu0 0
    %552 = vmatpush1.bf16.msra.mxu0 0
    %553 = vmatprep.subr.bf16.mxu0 0
    %554 = vmatpush1.bf16.msra.mxu0 0
    %555 = vmatprep.subr.bf16.mxu0 0
    %556 = vmatpush1.bf16.msra.mxu0 0
    %557 = vmatprep.subr.bf16.mxu0 0
    %558 = vmatpush1.bf16.msra.mxu0 0
    %559 = vmatprep.subr.bf16.mxu0 0
    %560 = vmatpush1.bf16.msra.mxu0 0
    %561 = vmatprep.subr.bf16.mxu0 0
    %562 = vmatpush1.bf16.msra.mxu0 0
    %563 = vmatprep.subr.bf16.mxu0 0
    %564 = vmatpush1.bf16.msra.mxu0 0
    %565 = vmatprep.subr.bf16.mxu0 0
    %566 = vmatpush1.bf16.msra.mxu0 0
    %567 = vmatprep.subr.bf16.mxu0 0
    %568 = vmatpush1.bf16.msra.mxu0 0
    %569 = vmatprep.subr.bf16.mxu0 0
    %570 = vmatpush1.bf16.msra.mxu0 0
    %571 = vmatprep.mubr.bf16.mxu0 0
    %572 = vmatmul.mubr.bf16.gmra.mrb[0].mxu0 %v265
    %v573 = vpop.f32.mrb[0].mxu0
    %v574 = vadd.f32 0.0, %v573
    %v575 = vpop.f32.mrb[0].mxu0
    %v576 = vadd.f32 0.0, %v575
    %v577 = vpop.f32.mrb[0].mxu0
    %v578 = vpop.f32.mrb[0].mxu0
    %579 = vdwg.mxu0
    %v580 = vadd.f32 %v420, %v316
    %v581 = vadd.f32 %v422, %v316
    %s582 = scalar_lea.vmem [#allocation2], 64
    %583 = vst [vmem:[%s582] sm:$0xff] %v580
    %584 = vst [vmem:[%s582 + $0x8] sm:$0xff] %v581
    %v585 = vadd.f32 %v424, %v478
    %v586 = vadd.f32 %v426, %v480
    %v587 = vadd.f32 %v585, %v316
    %v588 = vadd.f32 %v586, %v316
    %589 = vst [vmem:[%s582 + $0x10] sm:$0xff] %v587
    %590 = vst [vmem:[%s582 + $0x18] sm:$0xff] %v588
    %v591 = vadd.f32 %v430, %v526
    %v592 = vadd.f32 %v432, %v528
    %v593 = vadd.f32 %v591, %v316
    %v594 = vadd.f32 %v592, %v316
    %595 = vst [vmem:[%s582 + $0x20] sm:$0xff] %v593
    %596 = vst [vmem:[%s582 + $0x28] sm:$0xff] %v594
    %v597 = vadd.f32 %v434, %v482
    %v598 = vadd.f32 %v436, %v484
    %v599 = vadd.f32 %v597, %v530
    %v600 = vadd.f32 %v598, %v532
    %v601 = vadd.f32 %v599, %v574
    %v602 = vadd.f32 %v600, %v576
    %v603 = vadd.f32 %v601, %v316
    %v604 = vadd.f32 %v602, %v316
    %605 = vst [vmem:[%s582 + $0x30] sm:$0xff] %v603
    %606 = vst [vmem:[%s582 + $0x38] sm:$0xff] %v604
    // Predicated region
    $region26: #{tpu_custom_call.1} parent=1 // pred_check
      _
    $region27: #{tpu_custom_call.1} parent=1 // pred_check_branch
      %608 = sbr.rel (0) target = $region29
    $region28: #{tpu_custom_call.1} parent=1 // pred_region
      %s610 = ssub.s32 2048, 2048
      %611 = vsyncadd [#allocation3], %s610
      %s612 = sshll.u32 [#allocation2], 4
      %s613 = int_to_ptr.vmem [resolvable:$true] %s612
      %618 = dma.vmem_to_hbm [thread:$0]  %s613, 2048, %s6, [#allocation3], 256, 256, 16
    $region29: #{tpu_custom_call.1} parent=1 // pred_fallthru
      _
    // Predicated region
    $region30: #{tpu_custom_call.1} parent=1 // pred_check
      _
    $region31: #{tpu_custom_call.1} parent=1 // pred_check_branch
      %620 = sbr.rel (0) target = $region33
    $region32: #{tpu_custom_call.1} parent=1 // pred_region
      %621 = dma.done [#allocation3], 2048
    $region33: #{tpu_custom_call.1} parent=1 // pred_fallthru
      _
    %622 = vsyncpa [#allocation3], 1

</llo_original>
